<compile_context>
chip_gen: v5e
topology: v5e:2x2
jax: 0.10.0
libtpu: 0.0.40
codegen_flags: <defaults>
</compile_context>

<pallas_src>
import functools

import jax
import jax.numpy as jnp
from jax.experimental import pallas as pl
from jax.experimental.pallas import tpu as pltpu


def _round_up(x, m):
    return (x + m - 1) // m * m


def _vmem_capacity_bytes():
    # Conservative fallback (v7x per-TensorCore VMEM) if the query is
    # unavailable; works correctly (just smaller tiles) on bigger parts.
    try:
        return int(pltpu.get_tpu_info().vmem_capacity_bytes)
    except Exception:
        return 64 * 1024 * 1024


_VMEM_CAP = _vmem_capacity_bytes()
_VMEM_LIMIT = min((3 * _VMEM_CAP) // 4, 100 * 1024 * 1024)
if _VMEM_CAP >= 96 * 1024 * 1024:      # v5e / v6e (128 MiB VMEM)
    _TM_CAP, _TN_CAP, _TK_CAP = 512, 2048, 1024
else:                                   # v7x (64 MiB per TensorCore)
    _TM_CAP, _TN_CAP, _TK_CAP = 512, 1024, 512


# ---------------------------------------------------------------------------
# Kernels
# ---------------------------------------------------------------------------
def _linear_kernel_acc_bias(x_ref, w_ref, b_ref, o_ref, acc_ref):
    """Multi-step K reduction, bias fused in the epilogue."""
    k = pl.program_id(2)
    prod = jnp.dot(x_ref[...], w_ref[...], preferred_element_type=jnp.float32)

    @pl.when(k == 0)
    def _():
        acc_ref[...] = prod            # first step: no zero-init + add

    @pl.when(k != 0)
    def _():
        acc_ref[...] += prod

    @pl.when(k == pl.num_programs(2) - 1)
    def _():
        o_ref[...] = (acc_ref[...] + b_ref[...].astype(jnp.float32)).astype(o_ref.dtype)


def _linear_kernel_acc_nobias(x_ref, w_ref, o_ref, acc_ref):
    k = pl.program_id(2)
    prod = jnp.dot(x_ref[...], w_ref[...], preferred_element_type=jnp.float32)

    @pl.when(k == 0)
    def _():
        acc_ref[...] = prod

    @pl.when(k != 0)
    def _():
        acc_ref[...] += prod

    @pl.when(k == pl.num_programs(2) - 1)
    def _():
        o_ref[...] = acc_ref[...].astype(o_ref.dtype)


def _linear_kernel_single_bias(x_ref, w_ref, b_ref, o_ref):
    """Whole K fits one tile: no accumulator scratch / init / copy-out."""
    o_ref[...] = (
        jnp.dot(x_ref[...], w_ref[...], preferred_element_type=jnp.float32)
        + b_ref[...].astype(jnp.float32)
    ).astype(o_ref.dtype)


def _linear_kernel_single_nobias(x_ref, w_ref, o_ref):
    o_ref[...] = jnp.dot(
        x_ref[...], w_ref[...], preferred_element_type=jnp.float32
    ).astype(o_ref.dtype)


# ---------------------------------------------------------------------------
# Wrapper
# ---------------------------------------------------------------------------
@functools.partial(
    jax.jit, static_argnames=("tm", "tn", "tk", "compute_dtype")
)
def linear_forward(x, weight, bias=None, *, tm=None, tn=None, tk=None,
                   compute_dtype=jnp.bfloat16):
    """out = x @ weight (+ bias), tiled Pallas matmul with f32 accumulation.

    compute_dtype: MXU input dtype (default bf16 -> 3-6x MXU throughput and
    half the DMA bytes vs f32 on v6e/v7x; accumulation stays f32 and the
    output keeps x.dtype).  Pass jnp.float32 for bit-exact f32 math.
    """
    M, K = x.shape
    K2, N = weight.shape
    assert K == K2, f"fan_in mismatch: {K} vs {K2}"
    out_dtype = x.dtype
    if compute_dtype is None:
        compute_dtype = x.dtype
    comp_itemsize = jnp.dtype(compute_dtype).itemsize

    # bf16 packs 16 rows per sublane group -> 16-aligned tm when it fits.
    sub = 16 if (comp_itemsize <= 2 and M >= 16) else 8

    tm_given, tn_given = tm is not None, tn is not None
    tm = tm if tm_given else min(_TM_CAP, _round_up(M, sub))
    tn = tn if tn_given else min(_TN_CAP, _round_up(N, 128))
    tk = tk if tk is not None else min(_TK_CAP, _round_up(K, 128))
    assert tm % 8 == 0, "tm must be a multiple of 8"
    assert tn % 128 == 0, "tn must be a multiple of 128 (lane-dense output)"
    assert tk % 128 == 0, "tk must be a multiple of 128"

    # v7x has 2 TensorCores sharded over the parallel grid axes: make sure the
    # (M, N) grid has at least 2 blocks whenever the shape allows it.
    if pl.cdiv(M, tm) * pl.cdiv(N, tn) < 2:
        if not tn_given and N > 128:
            tn = _round_up(pl.cdiv(N, 2), 128)
        elif not tm_given and M > sub:
            tm = _round_up(pl.cdiv(M, 2), sub)

    # Only K needs explicit zero-padding (garbage must not enter the
    # reduction).  Ragged M/N edge blocks are masked by Pallas on store, so
    # no pad / slice HBM round-trips for those dimensions.
    xp = x if x.dtype == compute_dtype else x.astype(compute_dtype)
    wp = weight if weight.dtype == compute_dtype else weight.astype(compute_dtype)
    Kp = _round_up(K, tk)
    if Kp != K:
        xp = jnp.pad(xp, ((0, 0), (0, Kp - K)))
        wp = jnp.pad(wp, ((0, Kp - K), (0, 0)))

    has_bias = bias is not None
    nk = Kp // tk
    gm, gn = pl.cdiv(M, tm), pl.cdiv(N, tn)
    grid = (gm, gn, nk)

    in_specs = [
        pl.BlockSpec((tm, tk), lambda i, j, k: (i, k)),   # x tile
        pl.BlockSpec((tk, tn), lambda i, j, k: (k, j)),   # weight tile
    ]
    operands = [xp, wp]
    if has_bias:
        operands.append(bias.reshape(1, N))
        in_specs.append(pl.BlockSpec((1, tn), lambda i, j, k: (0, j)))

    if nk == 1:
        # Skip the accumulator round-trip entirely.
        kernel = _linear_kernel_single_bias if has_bias else _linear_kernel_single_nobias
        scratch_shapes = []
    else:
        kernel = _linear_kernel_acc_bias if has_bias else _linear_kernel_acc_nobias
        scratch_shapes = [pltpu.VMEM((tm, tn), jnp.float32)]

    out_itemsize = jnp.dtype(out_dtype).itemsize
    bias_bytes = (N * jnp.dtype(bias.dtype).itemsize * gm) if has_bias else 0
    cost = pl.CostEstimate(
        flops=2 * M * N * K,
        transcendentals=0,
        bytes_accessed=(M * Kp * comp_itemsize) * gn      # x re-read per N-tile
                       + (Kp * N * comp_itemsize) * gm    # w re-read per M-tile
                       + M * N * out_itemsize
                       + bias_bytes,
    )

    # TODO(synk): if a profile shows DMA exposed at output-tile boundaries,
    # add pipeline_mode=pl.Buffered(3) on the weight BlockSpec.
    return pl.pallas_call(
        kernel,
        out_shape=jax.ShapeDtypeStruct((M, N), out_dtype),
        grid_spec=pltpu.PrefetchScalarGridSpec(
            num_scalar_prefetch=0,
            grid=grid,
            in_specs=in_specs,
            out_specs=pl.BlockSpec((tm, tn), lambda i, j, k: (i, j)),
            scratch_shapes=scratch_shapes,
        ),
        compiler_params=pltpu.CompilerParams(
            # M/N axes parallel (megacore sharding on v7x), K reduction last.
            dimension_semantics=("parallel", "parallel", "arbitrary"),
            vmem_limit_bytes=_VMEM_LIMIT,
        ),
        cost_estimate=cost,
    )(*operands)


class LinearPallas:
    """Mirrors torch Linear: weight ~ randn(fan_in, fan_out)/sqrt(fan_in), bias=0."""

    def __init__(self, fan_in, fan_out, bias=True, *, key,
                 compute_dtype=jnp.bfloat16):
        self.weight = (
            jax.random.normal(key, (fan_in, fan_out), dtype=jnp.float32)
            / fan_in ** 0.5
        )
        self.bias = jnp.zeros((fan_out,), dtype=jnp.float32) if bias else None
        self.compute_dtype = compute_dtype
        # Cast once at construction -> no per-forward weight convert in HBM.
        self._weight_c = self.weight.astype(compute_dtype)

    def __call__(self, x):
        # bias=None compiles a dedicated no-bias kernel (no fake zeros add).
        return linear_forward(x, self._weight_c, self.bias,
                              compute_dtype=self.compute_dtype)


if __name__ == "__main__":
    key = jax.random.PRNGKey(0)
    k_x, k_w, k_x2, k_w2 = jax.random.split(key, 4)

    # --- small test matching the module's synthetic training shapes --------
    batch, fan_in, fan_out = 8, 32, 32
    x = jax.random.normal(k_x, (batch, fan_in), dtype=jnp.float32)
    layer = LinearPallas(fan_in, fan_out, bias=True, key=k_w)
    out = jax.block_until_ready(layer(x))

    # Reference for the default bf16-compute / f32-accumulate path.
    xb = x.astype(jnp.bfloat16).astype(jnp.float32)
    wb = layer.weight.astype(jnp.bfloat16).astype(jnp.float32)
    ref = jnp.dot(xb, wb, precision=jax.lax.Precision.HIGHEST) + layer.bias
    assert out.shape == (batch, fan_out)
    assert out.dtype == jnp.float32
    assert jnp.allclose(out, ref, atol=1e-4, rtol=1e-4)
    # Sanity vs full-f32 math (bf16 inputs, f32 accumulation => loose tol).
    ref32 = jnp.dot(x, layer.weight, precision=jax.lax.Precision.HIGHEST) + layer.bias
    assert jnp.allclose(out, ref32, atol=5e-2, rtol=5e-2)

    # --- ragged shape, multi-step K reduction, no bias (masked edge blocks) -
    M2, K2, N2 = 136, 384, 200
    x2 = jax.random.normal(k_x2, (M2, K2), dtype=jnp.float32)
    w2 = jax.random.normal(k_w2, (K2, N2), dtype=jnp.float32) / K2 ** 0.5
    out2 = jax.block_until_ready(
        linear_forward(x2, w2, None, tm=64, tn=128, tk=128)
    )
    ref2 = jnp.dot(x2.astype(jnp.bfloat16).astype(jnp.float32),
                   w2.astype(jnp.bfloat16).astype(jnp.float32),
                   precision=jax.lax.Precision.HIGHEST)
    assert out2.shape == (M2, N2)
    assert jnp.allclose(out2, ref2, atol=2e-4, rtol=2e-4)

    # --- exact f32 path still available -------------------------------------
    out3 = jax.block_until_ready(
        linear_forward(x2, w2, None, compute_dtype=jnp.float32)
    )
    ref3 = jnp.dot(x2, w2, precision=jax.lax.Precision.HIGHEST)
    assert jnp.allclose(out3, ref3, atol=1e-4, rtol=1e-4)

    print("KERNEL_OK")
</pallas_src>

<mosaic_0001>
module attributes {stable_mosaic.version = 11 : i64} {
  func.func @_linear_kernel_single_bias(%arg0: i32, %arg1: i32, %arg2: i32, %arg3: memref<8x128xbf16, #tpu.memory_space<vmem>>, %arg4: memref<128x128xbf16, #tpu.memory_space<vmem>>, %arg5: memref<1x128xf32, #tpu.memory_space<vmem>>, %arg6: memref<8x128xf32, #tpu.memory_space<vmem>>) attributes {dimension_semantics = [#tpu.dimension_semantics<parallel>, #tpu.dimension_semantics<parallel>, #tpu.dimension_semantics<arbitrary>], iteration_bounds = array<i64: 1, 1, 1>, scalar_prefetch = 0 : i64, scratch_operands = 0 : i64, tpu.core_type = #tpu.core_type<tc>, window_params = [{transform_indices = @transform_0, window_bounds = array<i64: 8, 128>}, {transform_indices = @transform_1, window_bounds = array<i64: 128, 128>}, {transform_indices = @transform_2, window_bounds = array<i64: 1, 128>}, {transform_indices = @transform_3, window_bounds = array<i64: 8, 128>}]} {
    %c0 = arith.constant 0 : index
    %c0_0 = arith.constant 0 : index
    %0 = vector.load %arg3[%c0, %c0_0] : memref<8x128xbf16, #tpu.memory_space<vmem>>, vector<8x128xbf16>
    %c0_1 = arith.constant 0 : index
    %c0_2 = arith.constant 0 : index
    %1 = vector.load %arg4[%c0_1, %c0_2] : memref<128x128xbf16, #tpu.memory_space<vmem>>, vector<128x128xbf16>
    %cst = arith.constant dense<0.000000e+00> : vector<8x128xf32>
    %2 = tpu.matmul %0, %1, %cst {dimension_numbers = #tpu.dot_dimension_numbers<[1], [0], [0], [1], [0, 0, 1, 1], [], []>} : vector<8x128xbf16>, vector<128x128xbf16>, vector<8x128xf32> -> vector<8x128xf32>
    %c0_3 = arith.constant 0 : index
    %c0_4 = arith.constant 0 : index
    %3 = vector.load %arg5[%c0_3, %c0_4] : memref<1x128xf32, #tpu.memory_space<vmem>>, vector<1x128xf32>
    %4 = vector.broadcast %3 : vector<1x128xf32> to vector<8x128xf32>
    %5 = arith.addf %2, %4 : vector<8x128xf32>
    %c0_5 = arith.constant 0 : index
    %c0_6 = arith.constant 0 : index
    %6 = vector.load %arg6[%c0_5, %c0_6] : memref<8x128xf32, #tpu.memory_space<vmem>>, vector<8x128xf32>
    tpu.vector_store %arg6[%c0_5, %c0_6], %5 {strides = array<i32>} : memref<8x128xf32, #tpu.memory_space<vmem>>, vector<8x128xf32>,
    return
  }
  func.func @transform_0(%arg0: i32, %arg1: i32, %arg2: i32) -> (i32, i32) {
    %c0_i32 = arith.constant 0 : i32
    return %arg0, %arg2 : i32, i32
  }
  func.func @transform_1(%arg0: i32, %arg1: i32, %arg2: i32) -> (i32, i32) {
    %c0_i32 = arith.constant 0 : i32
    return %arg2, %arg1 : i32, i32
  }
  func.func @transform_2(%arg0: i32, %arg1: i32, %arg2: i32) -> (i32, i32) {
    %c0_i32 = arith.constant 0 : i32
    %c0_i32_0 = arith.constant 0 : i32
    return %c0_i32, %arg1 : i32, i32
  }
  func.func @transform_3(%arg0: i32, %arg1: i32, %arg2: i32) -> (i32, i32) {
    %c0_i32 = arith.constant 0 : i32
    return %arg0, %arg1 : i32, i32
  }
}

</mosaic_0001>

<llo_original>
// kernel: linear_forward.1
$region0: #{linear_forward.1}
  #allocation0 [shape = 'u32[]', space=smem, size = 0x4, offset = 0x4, fixed_abs, tag = 'smem constant byte address 0x4 - core index']
  #allocation1 [shape = 'u32[72,128]{1,0:T(1,128)}', space=vmem, size = 0x9000, scoped, tag = 'internal scratch']
  %s0 = inlined_call_operand.vmem [shape: bf16[8,128], index: 0, kind: input, shape index: {}]
  %s1 = inlined_call_operand.vmem [shape: bf16[128,32], index: 1, kind: input, shape index: {}]
  %s2 = inlined_call_operand.vmem [shape: f32[1,32], index: 2, kind: input, shape index: {}]
  %s3 = inlined_call_operand.hbm [shape: f32[8,32], index: 3, kind: output, shape index: {}]
  %s4 = sld [smem:[#allocation0]]
  $region22: #{linear_forward.1} parent=0
    _
  %s6 = ssub.s32 1, %s4
  %s7 = scalar_select 0, %s6, %s4
  $region1: #{linear_forward.1} parent=0
    #allocation2 [shape = 'u8[4096]{0}', space=vmem, size = 0x1000, scoped, tag = 'output window, operand 0, single buffered']
    #allocation3 [shape = 's32[1]{0}', space=sflag, size = 0x4, scoped, tag = 'scoped memory for linear_forward.1']
    %8 = vsyncpa [#allocation3], 0
    // Predicated region
    $region2: #{linear_forward.1} parent=1 // pred_check
      _
    $region3: #{linear_forward.1} parent=1 // pred_check_branch
      %10 = sbr.rel (0) target = $region5
    $region4: #{linear_forward.1} parent=1 // pred_region
      _
    $region5: #{linear_forward.1} parent=1 // pred_fallthru
      _
    // Predicated region
    $region6: #{linear_forward.1} parent=1 // pred_check
      _
    $region7: #{linear_forward.1} parent=1 // pred_check_branch
      %12 = sbr.rel (0) target = $region9
    $region8: #{linear_forward.1} parent=1 // pred_region
      _
    $region9: #{linear_forward.1} parent=1 // pred_fallthru
      _
    // Predicated region
    $region10: #{linear_forward.1} parent=1 // pred_check
      _
    $region11: #{linear_forward.1} parent=1 // pred_check_branch
      %14 = sbr.rel (0) target = $region13
    $region12: #{linear_forward.1} parent=1 // pred_region
      _
    $region13: #{linear_forward.1} parent=1 // pred_fallthru
      _
    %v15 = vld [vmem:[%s0] sm:$0xf]
    %v16 = vld [vmem:[%s1] sm:$0xf]
    %v17 = vld [vmem:[%s1 + $0x4] sm:$0xf]
    %v18 = vld [vmem:[%s1 + $0x8] sm:$0xf]
    %v19 = vld [vmem:[%s1 + $0xc] sm:$0xf]
    %v20 = vld [vmem:[%s1 + $0x10] sm:$0xf]
    %v21 = vld [vmem:[%s1 + $0x14] sm:$0xf]
    %v22 = vld [vmem:[%s1 + $0x18] sm:$0xf]
    %v23 = vld [vmem:[%s1 + $0x1c] sm:$0xf]
    %v24 = vld [vmem:[%s1 + $0x20] sm:$0xf]
    %v25 = vld [vmem:[%s1 + $0x24] sm:$0xf]
    %v26 = vld [vmem:[%s1 + $0x28] sm:$0xf]
    %v27 = vld [vmem:[%s1 + $0x2c] sm:$0xf]
    %v28 = vld [vmem:[%s1 + $0x30] sm:$0xf]
    %v29 = vld [vmem:[%s1 + $0x34] sm:$0xf]
    %v30 = vld [vmem:[%s1 + $0x38] sm:$0xf]
    %v31 = vld [vmem:[%s1 + $0x3c] sm:$0xf]
    %v32 = vld [vmem:[%s2] sm:$0x1]
    %v34 = vperm.slane %v32, 0
    %v52 = vunpack.c.l.b16 %v16
    %v53 = vunpack.c.l.b16 %v17
    %v54 = vunpack.c.l.b16 %v18
    %v55 = vunpack.c.l.b16 %v19
    %v56 = vunpack.c.l.b16 %v20
    %v57 = vunpack.c.l.b16 %v21
    %v58 = vunpack.c.l.b16 %v22
    %v59 = vunpack.c.l.b16 %v23
    %v60 = vunpack.c.l.b16 %v24
    %v61 = vunpack.c.l.b16 %v25
    %v62 = vunpack.c.l.b16 %v26
    %v63 = vunpack.c.l.b16 %v27
    %v64 = vunpack.c.l.b16 %v28
    %v65 = vunpack.c.l.b16 %v29
    %v66 = vunpack.c.l.b16 %v30
    %v67 = vunpack.c.l.b16 %v31
    %v68 = vpack.c.b16 %v53, %v52
    %v69 = vpack.c.b16 %v55, %v54
    %v70 = vpack.c.b16 %v57, %v56
    %v71 = vpack.c.b16 %v59, %v58
    %v72 = vpack.c.b16 %v61, %v60
    %v73 = vpack.c.b16 %v63, %v62
    %v74 = vpack.c.b16 %v65, %v64
    %v75 = vpack.c.b16 %v67, %v66
    %84 = vmatpush.bf16.msra.mxu0 %v75
    %85 = vmatpush.bf16.msra.mxu0 %v74
    %86 = vmatpush.bf16.msra.mxu0 %v73
    %87 = vmatpush.bf16.msra.mxu0 %v72
    %88 = vmatpush.bf16.msra.mxu0 %v71
    %89 = vmatpush.bf16.msra.mxu0 %v70
    %90 = vmatpush.bf16.msra.mxu0 %v69
    %91 = vmatpush.bf16.msra.mxu0 %v68
    %92 = vmatmul.bf16.gmra.mxu0 %v15
    %v93 = vpop.f32.mrf.mxu0
    %v94 = vadd.f32 %v34, %v93
    %v95 = vpop.f32.mrf.mxu0
    %96 = vdwg.mxu0
    %97 = vst [vmem:[#allocation2] sm:$0xff] %v94
    // Predicated region
    $region14: #{linear_forward.1} parent=1 // pred_check
      _
    $region15: #{linear_forward.1} parent=1 // pred_check_branch
      %99 = sbr.rel (0) target = $region17
    $region16: #{linear_forward.1} parent=1 // pred_region
      %101 = vsyncadd [#allocation3], 0
      %s103 = sshll.u32 [#allocation2], 4
      %s104 = int_to_ptr.vmem [resolvable:$true] %s103
      %s105 = sshll.u32 %s3, 4
      %s106 = int_to_ptr.hbm [resolvable:$true] %s105
      %108 = dma.vmem_to_hbm [thread:$0]  %s104, 128, %s106, [#allocation3]
    $region17: #{linear_forward.1} parent=1 // pred_fallthru
      _
    // Predicated region
    $region18: #{linear_forward.1} parent=1 // pred_check
      _
    $region19: #{linear_forward.1} parent=1 // pred_check_branch
      %110 = sbr.rel (0) target = $region21
    $region20: #{linear_forward.1} parent=1 // pred_region
      %112 = dma.done [#allocation3], 128
    $region21: #{linear_forward.1} parent=1 // pred_fallthru
      _
    %113 = vsyncpa [#allocation3], 1

</llo_original>
